<compile_context>
chip_gen: v7x
topology: tpu7x:2x2x1
jax: 0.10.0
libtpu: 0.0.40
codegen_flags: <defaults>
</compile_context>

<pallas_src>
import functools

import jax
import jax.numpy as jnp
from jax.experimental import pallas as pl
from jax.experimental.pallas import tpu as pltpu


def _round_up(n, m):
    return (n + m - 1) // m * m


def _tensorcores_per_chip():
    """v7x exposes 2 TensorCores per chip to a single Pallas grid."""
    try:
        kind = jax.devices()[0].device_kind.lower()
    except Exception:
        return 1
    return 2 if "v7" in kind else 1


def _choose_tiling(batch, num_tc):
    """Pick (tile_m, grid_m) minimizing batch padding.

    - tiles capped at 1024 rows (amortizes per-step overhead, still tiny in VMEM)
    - grid rounded up to a multiple of the TC count when the batch is big
      enough to feed every core
    - tile rows rounded to 16 (bf16 sublane pack); avoids dead-row padding.
    """
    cap = 1024
    grid_m = max(1, pl.cdiv(batch, cap))
    if num_tc > 1 and batch >= 128 * num_tc:
        grid_m = _round_up(grid_m, num_tc)
    tile_m = _round_up(pl.cdiv(batch, grid_m), 16)
    grid_m = pl.cdiv(batch, tile_m)
    return tile_m, grid_m


def _leaky_relu(x, slope=0.2):
    # mul + max (VPU) instead of compare + select.
    return jnp.maximum(x, slope * x)


def generator_kernel(x_ref,
                     w1_ref, b1_ref,
                     w2_ref, b2_ref,
                     w3_ref, b3_ref,
                     w4_ref, b4_ref,
                     o_ref):
    # x_ref: (tile_m, noise_dim) bf16.  Weights bf16, biases f32.
    # Matmuls run on the MXU's native bf16 path with f32 accumulation; bias
    # add + LeakyReLU + tanh happen in f32; activations are narrowed to bf16
    # only at the next matmul input / final store.
    h = jnp.dot(x_ref[...], w1_ref[...],
                preferred_element_type=jnp.float32) + b1_ref[...]
    h = _leaky_relu(h)

    h = jnp.dot(h.astype(jnp.bfloat16), w2_ref[...],
                preferred_element_type=jnp.float32) + b2_ref[...]
    h = _leaky_relu(h)

    h = jnp.dot(h.astype(jnp.bfloat16), w3_ref[...],
                preferred_element_type=jnp.float32) + b3_ref[...]
    h = _leaky_relu(h)

    h = jnp.dot(h.astype(jnp.bfloat16), w4_ref[...],
                preferred_element_type=jnp.float32) + b4_ref[...]
    o_ref[...] = jnp.tanh(h).astype(o_ref.dtype)


@functools.partial(jax.jit, static_argnames=("output_dim", "slice_output"))
def generator_forward(x, params, output_dim, slice_output=True):
    (w1, b1), (w2, b2), (w3, b3), (w4, b4) = params
    batch, noise_dim = x.shape
    out_pad = w4.shape[1]  # already lane-padded to a multiple of 128

    num_tc = _tensorcores_per_chip()
    tile_m, grid_m = _choose_tiling(batch, num_tc)
    batch_pad = tile_m * grid_m

    x_in = x.astype(jnp.bfloat16)
    if batch_pad != batch:
        # Explicit zero-pad so garbage rows never reach the stored region.
        x_in = jnp.pad(x_in, ((0, batch_pad - batch), (0, 0)))

    # Weights/biases: constant block index across the batch grid -> fetched
    # once and kept resident in VMEM for every batch tile.
    const = lambda a: pl.BlockSpec(a.shape, lambda i: (0, 0))

    # Advisory cost estimate so XLA schedules surrounding ops correctly.
    hid1, hid2, hid3 = w1.shape[1], w2.shape[1], w3.shape[1]
    flops = 2 * batch_pad * (noise_dim * hid1 + hid1 * hid2
                             + hid2 * hid3 + hid3 * out_pad)
    weight_bytes = sum(int(a.size) * a.dtype.itemsize
                       for a in (w1, b1, w2, b2, w3, b3, w4, b4))
    bytes_accessed = (batch_pad * noise_dim * 2          # x (bf16)
                      + weight_bytes
                      + batch_pad * out_pad * 2)         # output (bf16)
    cost = pl.CostEstimate(flops=flops,
                           transcendentals=batch_pad * out_pad,
                           bytes_accessed=bytes_accessed)

    out = pl.pallas_call(
        generator_kernel,
        out_shape=jax.ShapeDtypeStruct((batch_pad, out_pad), jnp.bfloat16),
        grid=(grid_m,),
        in_specs=[
            pl.BlockSpec((tile_m, noise_dim), lambda i: (i, 0)),
            const(w1), const(b1),
            const(w2), const(b2),
            const(w3), const(b3),
            const(w4), const(b4),
        ],
        out_specs=pl.BlockSpec((tile_m, out_pad), lambda i: (i, 0)),
        compiler_params=pltpu.CompilerParams(
            dimension_semantics=("parallel",)),
        cost_estimate=cost,
    )(x_in, w1, b1, w2, b2, w3, b3, w4, b4)

    if slice_output:
        return out[:batch, :output_dim]
    # Lane-padded result (batch_pad, out_pad): consumers can index it
    # themselves and save one full output-size HBM pass.
    return out


def init_generator_params(key, noise_dim, output_dim):
    """PyTorch-style Linear init (uniform(-1/sqrt(fan_in), 1/sqrt(fan_in))).

    Weights are stored [in_features, out_features] in bfloat16; biases are
    [1, out_features] float32 rows.  The final layer's output width is padded
    with zeros to a multiple of 128 for lane-dense stores (sliced off in the
    wrapper)."""
    dims = [noise_dim, 128, 256, 512, output_dim]
    params = []
    for i in range(4):
        fan_in, fan_out = dims[i], dims[i + 1]
        key, kw, kb = jax.random.split(key, 3)
        bound = fan_in ** -0.5
        w = jax.random.uniform(kw, (fan_in, fan_out), jnp.float32, -bound, bound)
        b = jax.random.uniform(kb, (1, fan_out), jnp.float32, -bound, bound)
        fan_out_pad = _round_up(fan_out, 128)
        if fan_out_pad != fan_out:
            w = jnp.pad(w, ((0, 0), (0, fan_out_pad - fan_out)))
            b = jnp.pad(b, ((0, 0), (0, fan_out_pad - fan_out)))
        params.append((w.astype(jnp.bfloat16), b))
    return tuple(params)


def _reference_forward(x, params, output_dim):
    """Pure-JAX reference mirroring the kernel math (bf16 matmul inputs,
    f32 accumulation/bias/activation)."""
    h = x.astype(jnp.bfloat16)
    for i, (w, b) in enumerate(params):
        h = jnp.dot(h, w, preferred_element_type=jnp.float32) + b
        if i < 3:
            h = jnp.where(h > 0, h, 0.2 * h).astype(jnp.bfloat16)
        else:
            h = jnp.tanh(h)
    return h[:, :output_dim]


if __name__ == "__main__":
    noise_dim = 32
    output_dim = 64

    key = jax.random.PRNGKey(0)
    k_params, k_x1, k_x2 = jax.random.split(key, 3)
    params = init_generator_params(k_params, noise_dim, output_dim)

    # Two batch sizes: a tiny one (single 16-row tile) and one that exercises
    # the larger-tile / multi-TC-aware path (384 -> zero padding on 1-TC
    # chips, two 192-row tiles on v7x).
    for batch, kx in ((8, k_x1), (384, k_x2)):
        x = jax.random.normal(kx, (batch, noise_dim), dtype=jnp.float32)

        out = generator_forward(x, params, output_dim)
        out = jax.block_until_ready(out)

        ref = _reference_forward(x, params, output_dim)
        assert out.shape == (batch, output_dim)
        # bf16 matmul inputs + bf16 output store -> relaxed tolerance.
        assert jnp.allclose(out.astype(jnp.float32), ref,
                            atol=2e-2, rtol=2e-2), \
            f"mismatch vs. reference at batch={batch}"

    print("KERNEL_OK")
</pallas_src>

<mosaic_0001>
module attributes {stable_mosaic.version = 11 : i64} {
  func.func @generator_kernel(%arg0: i32, %arg1: memref<16x32xbf16, #tpu.memory_space<vmem>>, %arg2: memref<32x128xbf16, #tpu.memory_space<vmem>>, %arg3: memref<1x128xf32, #tpu.memory_space<vmem>>, %arg4: memref<128x256xbf16, #tpu.memory_space<vmem>>, %arg5: memref<1x256xf32, #tpu.memory_space<vmem>>, %arg6: memref<256x512xbf16, #tpu.memory_space<vmem>>, %arg7: memref<1x512xf32, #tpu.memory_space<vmem>>, %arg8: memref<512x128xbf16, #tpu.memory_space<vmem>>, %arg9: memref<1x128xf32, #tpu.memory_space<vmem>>, %arg10: memref<16x128xbf16, #tpu.memory_space<vmem>>) attributes {dimension_semantics = [#tpu.dimension_semantics<parallel>], iteration_bounds = array<i64: 1>, scalar_prefetch = 0 : i64, scratch_operands = 0 : i64, tpu.core_type = #tpu.core_type<tc>, window_params = [{transform_indices = @transform_0, window_bounds = array<i64: 16, 32>}, {pipeline_mode = #tpu.pipeline_mode<synchronous>, transform_indices = @transform_1, window_bounds = array<i64: 32, 128>}, {pipeline_mode = #tpu.pipeline_mode<synchronous>, transform_indices = @transform_2, window_bounds = array<i64: 1, 128>}, {pipeline_mode = #tpu.pipeline_mode<synchronous>, transform_indices = @transform_3, window_bounds = array<i64: 128, 256>}, {pipeline_mode = #tpu.pipeline_mode<synchronous>, transform_indices = @transform_4, window_bounds = array<i64: 1, 256>}, {pipeline_mode = #tpu.pipeline_mode<synchronous>, transform_indices = @transform_5, window_bounds = array<i64: 256, 512>}, {pipeline_mode = #tpu.pipeline_mode<synchronous>, transform_indices = @transform_6, window_bounds = array<i64: 1, 512>}, {pipeline_mode = #tpu.pipeline_mode<synchronous>, transform_indices = @transform_7, window_bounds = array<i64: 512, 128>}, {pipeline_mode = #tpu.pipeline_mode<synchronous>, transform_indices = @transform_8, window_bounds = array<i64: 1, 128>}, {transform_indices = @transform_9, window_bounds = array<i64: 16, 128>}]} {
    %c0 = arith.constant 0 : index
    %c0_0 = arith.constant 0 : index
    %0 = vector.load %arg1[%c0, %c0_0] : memref<16x32xbf16, #tpu.memory_space<vmem>>, vector<16x32xbf16>
    %c0_1 = arith.constant 0 : index
    %c0_2 = arith.constant 0 : index
    %1 = vector.load %arg2[%c0_1, %c0_2] : memref<32x128xbf16, #tpu.memory_space<vmem>>, vector<32x128xbf16>
    %cst = arith.constant dense<0.000000e+00> : vector<16x128xf32>
    %2 = tpu.matmul %0, %1, %cst {dimension_numbers = #tpu.dot_dimension_numbers<[1], [0], [0], [1], [0, 0, 1, 1], [], []>} : vector<16x32xbf16>, vector<32x128xbf16>, vector<16x128xf32> -> vector<16x128xf32>
    %c0_3 = arith.constant 0 : index
    %c0_4 = arith.constant 0 : index
    %3 = vector.load %arg3[%c0_3, %c0_4] : memref<1x128xf32, #tpu.memory_space<vmem>>, vector<1x128xf32>
    %4 = vector.broadcast %3 : vector<1x128xf32> to vector<16x128xf32>
    %5 = arith.addf %2, %4 : vector<16x128xf32>
    %cst_5 = arith.constant 2.000000e-01 : f32
    %6 = vector.broadcast %cst_5 : f32 to vector<16x128xf32>
    %7 = arith.mulf %6, %5 : vector<16x128xf32>
    %8 = arith.maximumf %5, %7 : vector<16x128xf32>
    %9 = arith.truncf %8 : vector<16x128xf32> to vector<16x128xbf16>
    %c0_6 = arith.constant 0 : index
    %c0_7 = arith.constant 0 : index
    %10 = vector.load %arg4[%c0_6, %c0_7] : memref<128x256xbf16, #tpu.memory_space<vmem>>, vector<128x256xbf16>
    %cst_8 = arith.constant dense<0.000000e+00> : vector<16x256xf32>
    %11 = tpu.matmul %9, %10, %cst_8 {dimension_numbers = #tpu.dot_dimension_numbers<[1], [0], [0], [1], [0, 0, 1, 1], [], []>} : vector<16x128xbf16>, vector<128x256xbf16>, vector<16x256xf32> -> vector<16x256xf32>
    %c0_9 = arith.constant 0 : index
    %c0_10 = arith.constant 0 : index
    %12 = vector.load %arg5[%c0_9, %c0_10] : memref<1x256xf32, #tpu.memory_space<vmem>>, vector<1x256xf32>
    %13 = vector.broadcast %12 : vector<1x256xf32> to vector<16x256xf32>
    %14 = arith.addf %11, %13 : vector<16x256xf32>
    %cst_11 = arith.constant 2.000000e-01 : f32
    %15 = vector.broadcast %cst_11 : f32 to vector<16x256xf32>
    %16 = arith.mulf %15, %14 : vector<16x256xf32>
    %17 = arith.maximumf %14, %16 : vector<16x256xf32>
    %18 = arith.truncf %17 : vector<16x256xf32> to vector<16x256xbf16>
    %c0_12 = arith.constant 0 : index
    %c0_13 = arith.constant 0 : index
    %19 = vector.load %arg6[%c0_12, %c0_13] : memref<256x512xbf16, #tpu.memory_space<vmem>>, vector<256x512xbf16>
    %cst_14 = arith.constant dense<0.000000e+00> : vector<16x512xf32>
    %20 = tpu.matmul %18, %19, %cst_14 {dimension_numbers = #tpu.dot_dimension_numbers<[1], [0], [0], [1], [0, 0, 1, 1], [], []>} : vector<16x256xbf16>, vector<256x512xbf16>, vector<16x512xf32> -> vector<16x512xf32>
    %c0_15 = arith.constant 0 : index
    %c0_16 = arith.constant 0 : index
    %21 = vector.load %arg7[%c0_15, %c0_16] : memref<1x512xf32, #tpu.memory_space<vmem>>, vector<1x512xf32>
    %22 = vector.broadcast %21 : vector<1x512xf32> to vector<16x512xf32>
    %23 = arith.addf %20, %22 : vector<16x512xf32>
    %cst_17 = arith.constant 2.000000e-01 : f32
    %24 = vector.broadcast %cst_17 : f32 to vector<16x512xf32>
    %25 = arith.mulf %24, %23 : vector<16x512xf32>
    %26 = arith.maximumf %23, %25 : vector<16x512xf32>
    %27 = arith.truncf %26 : vector<16x512xf32> to vector<16x512xbf16>
    %c0_18 = arith.constant 0 : index
    %c0_19 = arith.constant 0 : index
    %28 = vector.load %arg8[%c0_18, %c0_19] : memref<512x128xbf16, #tpu.memory_space<vmem>>, vector<512x128xbf16>
    %cst_20 = arith.constant dense<0.000000e+00> : vector<16x128xf32>
    %29 = tpu.matmul %27, %28, %cst_20 {dimension_numbers = #tpu.dot_dimension_numbers<[1], [0], [0], [1], [0, 0, 1, 1], [], []>} : vector<16x512xbf16>, vector<512x128xbf16>, vector<16x128xf32> -> vector<16x128xf32>
    %c0_21 = arith.constant 0 : index
    %c0_22 = arith.constant 0 : index
    %30 = vector.load %arg9[%c0_21, %c0_22] : memref<1x128xf32, #tpu.memory_space<vmem>>, vector<1x128xf32>
    %31 = vector.broadcast %30 : vector<1x128xf32> to vector<16x128xf32>
    %32 = arith.addf %29, %31 : vector<16x128xf32>
    %33 = math.tanh %32 : vector<16x128xf32>
    %34 = arith.truncf %33 : vector<16x128xf32> to vector<16x128xbf16>
    %c0_23 = arith.constant 0 : index
    %c0_24 = arith.constant 0 : index
    %35 = vector.load %arg10[%c0_23, %c0_24] : memref<16x128xbf16, #tpu.memory_space<vmem>>, vector<16x128xbf16>
    tpu.vector_store %arg10[%c0_23, %c0_24], %34 {strides = array<i32>} : memref<16x128xbf16, #tpu.memory_space<vmem>>, vector<16x128xbf16>,
    return
  }
  func.func @transform_0(%arg0: i32) -> (i32, i32) {
    %c0_i32 = arith.constant 0 : i32
    %c0_i32_0 = arith.constant 0 : i32
    return %arg0, %c0_i32 : i32, i32
  }
  func.func @transform_1(%arg0: i32) -> (i32, i32) {
    %c0_i32 = arith.constant 0 : i32
    %c0_i32_0 = arith.constant 0 : i32
    %c0_i32_1 = arith.constant 0 : i32
    return %c0_i32, %c0_i32_0 : i32, i32
  }
  func.func @transform_2(%arg0: i32) -> (i32, i32) {
    %c0_i32 = arith.constant 0 : i32
    %c0_i32_0 = arith.constant 0 : i32
    %c0_i32_1 = arith.constant 0 : i32
    return %c0_i32, %c0_i32_0 : i32, i32
  }
  func.func @transform_3(%arg0: i32) -> (i32, i32) {
    %c0_i32 = arith.constant 0 : i32
    %c0_i32_0 = arith.constant 0 : i32
    %c0_i32_1 = arith.constant 0 : i32
    return %c0_i32, %c0_i32_0 : i32, i32
  }
  func.func @transform_4(%arg0: i32) -> (i32, i32) {
    %c0_i32 = arith.constant 0 : i32
    %c0_i32_0 = arith.constant 0 : i32
    %c0_i32_1 = arith.constant 0 : i32
    return %c0_i32, %c0_i32_0 : i32, i32
  }
  func.func @transform_5(%arg0: i32) -> (i32, i32) {
    %c0_i32 = arith.constant 0 : i32
    %c0_i32_0 = arith.constant 0 : i32
    %c0_i32_1 = arith.constant 0 : i32
    return %c0_i32, %c0_i32_0 : i32, i32
  }
  func.func @transform_6(%arg0: i32) -> (i32, i32) {
    %c0_i32 = arith.constant 0 : i32
    %c0_i32_0 = arith.constant 0 : i32
    %c0_i32_1 = arith.constant 0 : i32
    return %c0_i32, %c0_i32_0 : i32, i32
  }
  func.func @transform_7(%arg0: i32) -> (i32, i32) {
    %c0_i32 = arith.constant 0 : i32
    %c0_i32_0 = arith.constant 0 : i32
    %c0_i32_1 = arith.constant 0 : i32
    return %c0_i32, %c0_i32_0 : i32, i32
  }
  func.func @transform_8(%arg0: i32) -> (i32, i32) {
    %c0_i32 = arith.constant 0 : i32
    %c0_i32_0 = arith.constant 0 : i32
    %c0_i32_1 = arith.constant 0 : i32
    return %c0_i32, %c0_i32_0 : i32, i32
  }
  func.func @transform_9(%arg0: i32) -> (i32, i32) {
    %c0_i32 = arith.constant 0 : i32
    %c0_i32_0 = arith.constant 0 : i32
    return %arg0, %c0_i32 : i32, i32
  }
}

</mosaic_0001>

<llo_original>
// kernel: generator_forward.1
$region0: #{generator_forward.1}
  #allocation0 [shape = 'u32[]', space=smem, size = 0x4, offset = 0x4, fixed_abs, tag = 'smem constant byte address 0x4 - core index']
  #allocation1 [shape = 'u32[144,128]{1,0:T(1,128)}', space=vmem, size = 0x12000, scoped, tag = 'internal scratch']
  %s0 = inlined_call_operand.vmem [shape: bf16[16,32], index: 0, kind: input, shape index: {}]
  %s1 = inlined_call_operand.vmem [shape: bf16[32,128], index: 1, kind: input, shape index: {}]
  %s2 = inlined_call_operand.vmem [shape: f32[1,128], index: 2, kind: input, shape index: {}]
  %s3 = inlined_call_operand.hbm [shape: bf16[128,256], index: 3, kind: input, shape index: {}]
  %s4 = inlined_call_operand.vmem [shape: f32[1,256], index: 4, kind: input, shape index: {}]
  %s5 = inlined_call_operand.hbm [shape: bf16[256,512], index: 5, kind: input, shape index: {}]
  %s6 = inlined_call_operand.vmem [shape: f32[1,512], index: 6, kind: input, shape index: {}]
  %s7 = inlined_call_operand.hbm [shape: bf16[512,128], index: 7, kind: input, shape index: {}]
  %s8 = inlined_call_operand.vmem [shape: f32[1,128], index: 8, kind: input, shape index: {}]
  %s9 = inlined_call_operand.vmem [shape: bf16[16,128], index: 9, kind: output, shape index: {}]
  %s10 = sld [smem:[#allocation0]]
  $region58: #{generator_forward.1} parent=0
    _
  %s12 = ssub.s32 1, %s10
  %s13 = scalar_select 0, %s12, %s10
  $region1: #{generator_forward.1} parent=0
    #allocation2 [shape = 'u8[65536]{0}', space=vmem, size = 0x10000, scoped, tag = 'input window, operand 3, single buffered']
    #allocation3 [shape = 's32[1]{0}', space=sflag, size = 0x4, scoped, tag = 'scoped memory for generator_forward.1']
    #allocation4 [shape = 'u8[262144]{0}', space=vmem, size = 0x40000, scoped, tag = 'input window, operand 5, single buffered']
    #allocation5 [shape = 's32[1]{0}', space=sflag, size = 0x4, scoped, tag = 'scoped memory for generator_forward.1']
    #allocation6 [shape = 'u8[131072]{0}', space=vmem, size = 0x20000, scoped, tag = 'input window, operand 7, single buffered']
    %14 = vsyncpa [#allocation3], 0
    %15 = vsyncpa [#allocation5], 0
    // Predicated region
    $region2: #{generator_forward.1} parent=1 // pred_check
      _
    $region3: #{generator_forward.1} parent=1 // pred_check_branch
      %17 = sbr.rel (0) target = $region5
    $region4: #{generator_forward.1} parent=1 // pred_region
      _
    $region5: #{generator_forward.1} parent=1 // pred_fallthru
      _
    // Predicated region
    $region6: #{generator_forward.1} parent=1 // pred_check
      _
    $region7: #{generator_forward.1} parent=1 // pred_check_branch
      %19 = sbr.rel (0) target = $region9
    $region8: #{generator_forward.1} parent=1 // pred_region
      _
    $region9: #{generator_forward.1} parent=1 // pred_fallthru
      _
    // Predicated region
    $region10: #{generator_forward.1} parent=1 // pred_check
      _
    $region11: #{generator_forward.1} parent=1 // pred_check_branch
      %21 = sbr.rel (0) target = $region13
    $region12: #{generator_forward.1} parent=1 // pred_region
      _
    $region13: #{generator_forward.1} parent=1 // pred_fallthru
      _
    // Predicated region
    $region14: #{generator_forward.1} parent=1 // pred_check
      _
    $region15: #{generator_forward.1} parent=1 // pred_check_branch
      %23 = sbr.rel (0) target = $region17
    $region16: #{generator_forward.1} parent=1 // pred_region
      %s25 = ssub.s32 2048, 2048
      %26 = vsyncadd [#allocation3], %s25
      %s27 = sshll.u32 [#allocation2], 4
      %s28 = int_to_ptr.vmem [resolvable:$true] %s27
      %33 = dma.hbm_to_vmem [thread:$0]  %s3, 2048, %s28, [#allocation3], 128, 128, 8
    $region17: #{generator_forward.1} parent=1 // pred_fallthru
      _
    // Predicated region
    $region18: #{generator_forward.1} parent=1 // pred_check
      _
    $region19: #{generator_forward.1} parent=1 // pred_check_branch
      %35 = sbr.rel (0) target = $region21
    $region20: #{generator_forward.1} parent=1 // pred_region
      _
    $region21: #{generator_forward.1} parent=1 // pred_fallthru
      _
    // Predicated region
    $region22: #{generator_forward.1} parent=1 // pred_check
      _
    $region23: #{generator_forward.1} parent=1 // pred_check_branch
      %37 = sbr.rel (0) target = $region25
    $region24: #{generator_forward.1} parent=1 // pred_region
      %s39 = ssub.s32 8192, 8192
      %40 = vsyncadd [#allocation5], %s39
      %s41 = sshll.u32 [#allocation4], 4
      %s42 = int_to_ptr.vmem [resolvable:$true] %s41
      %47 = dma.hbm_to_vmem [thread:$0]  %s5, 8192, %s42, [#allocation5], 256, 256, 16
    $region25: #{generator_forward.1} parent=1 // pred_fallthru
      _
    // Predicated region
    $region26: #{generator_forward.1} parent=1 // pred_check
      _
    $region27: #{generator_forward.1} parent=1 // pred_check_branch
      %49 = sbr.rel (0) target = $region29
    $region28: #{generator_forward.1} parent=1 // pred_region
      _
    $region29: #{generator_forward.1} parent=1 // pred_fallthru
      _
    // Predicated region
    $region30: #{generator_forward.1} parent=1 // pred_check
      _
    $region31: #{generator_forward.1} parent=1 // pred_check_branch
      %51 = sbr.rel (0) target = $region33
    $region32: #{generator_forward.1} parent=1 // pred_region
      %s53 = ssub.s32 4096, 4096
      %54 = vsyncadd [#allocation5], %s53
      %s55 = sshll.u32 [#allocation6], 4
      %s56 = int_to_ptr.vmem [resolvable:$true] %s55
      %61 = dma.hbm_to_vmem [thread:$0]  %s7, 4096, %s56, [#allocation5], 64, 64, 4
    $region33: #{generator_forward.1} parent=1 // pred_fallthru
      _
    // Predicated region
    $region34: #{generator_forward.1} parent=1 // pred_check
      _
    $region35: #{generator_forward.1} parent=1 // pred_check_branch
      %63 = sbr.rel (0) target = $region37
    $region36: #{generator_forward.1} parent=1 // pred_region
      _
    $region37: #{generator_forward.1} parent=1 // pred_fallthru
      _
    // Predicated region
    $region38: #{generator_forward.1} parent=1 // pred_check
      _
    $region39: #{generator_forward.1} parent=1 // pred_check_branch
      %65 = sbr.rel (0) target = $region41
    $region40: #{generator_forward.1} parent=1 // pred_region
      %66 = dma.done [#allocation3], 2048
    $region41: #{generator_forward.1} parent=1 // pred_fallthru
      _
    // Predicated region
    $region42: #{generator_forward.1} parent=1 // pred_check
      _
    $region43: #{generator_forward.1} parent=1 // pred_check_branch
      %68 = sbr.rel (0) target = $region45
    $region44: #{generator_forward.1} parent=1 // pred_region
      %69 = dma.done [#allocation5], 8192
    $region45: #{generator_forward.1} parent=1 // pred_fallthru
      _
    // Predicated region
    $region46: #{generator_forward.1} parent=1 // pred_check
      _
    $region47: #{generator_forward.1} parent=1 // pred_check_branch
      %71 = sbr.rel (0) target = $region49
    $region48: #{generator_forward.1} parent=1 // pred_region
      %72 = dma.done [#allocation5], 4096
    $region49: #{generator_forward.1} parent=1 // pred_fallthru
      _
    %v74 = vld [vmem:[%s0] sm:$0xf]
    %v75 = vld [vmem:[%s0 + $0x4] sm:$0xf]
    %v76 = vld [vmem:[%s1] sm:$0xf]
    %v77 = vld [vmem:[%s1 + $0x4] sm:$0xf]
    %v78 = vld [vmem:[%s1 + $0x8] sm:$0xf]
    %v79 = vld [vmem:[%s1 + $0xc] sm:$0xf]
    %v80 = vld [vmem:[%s2] sm:$0x1]
    %v82 = vlaneseq
    %v83 = vshrl.u32 %v82, 7
    %v84 = vsub.s32 0, %v83
    %v85 = vrot.slane %v80, %v84
    %v89 = vunpack.c.l.b16 %v74
    %v90 = vunpack.c.l.b16 %v75
    %v91 = vpack.c.b16 %v90, %v89
    %v96 = vunpack.c.l.b16 %v76
    %v97 = vunpack.c.l.b16 %v77
    %v98 = vunpack.c.l.b16 %v78
    %v99 = vunpack.c.l.b16 %v79
    %v100 = vpack.c.b16 %v97, %v96
    %v101 = vpack.c.b16 %v99, %v98
    %vm104 = vcmask 261120
    %v106 = vsel %vm104, %v91, 0
    %108 = vmatprep.subr.bf16.mxu0 0
    %109 = vmatpush1.bf16.msra.mxu0 %v100
    %110 = vmatprep.subr.bf16.mxu0 0
    %111 = vmatpush1.bf16.msra.mxu0 %v101
    %112 = vmatprep.subr.bf16.mxu0 0
    %113 = vmatpush1.bf16.msra.mxu0 0
    %114 = vmatprep.subr.bf16.mxu0 0
    %115 = vmatpush1.bf16.msra.mxu0 0
    %116 = vmatprep.subr.bf16.mxu0 0
    %117 = vmatpush1.bf16.msra.mxu0 0
    %118 = vmatprep.subr.bf16.mxu0 0
    %119 = vmatpush1.bf16.msra.mxu0 0
    %120 = vmatprep.subr.bf16.mxu0 0
    %121 = vmatpush1.bf16.msra.mxu0 0
    %122 = vmatprep.subr.bf16.mxu0 0
    %123 = vmatpush1.bf16.msra.mxu0 0
    %124 = vmatprep.subr.bf16.mxu0 0
    %125 = vmatpush1.bf16.msra.mxu0 0
    %126 = vmatprep.subr.bf16.mxu0 0
    %127 = vmatpush1.bf16.msra.mxu0 0
    %128 = vmatprep.subr.bf16.mxu0 0
    %129 = vmatpush1.bf16.msra.mxu0 0
    %130 = vmatprep.subr.bf16.mxu0 0
    %131 = vmatpush1.bf16.msra.mxu0 0
    %132 = vmatprep.subr.bf16.mxu0 0
    %133 = vmatpush1.bf16.msra.mxu0 0
    %134 = vmatprep.subr.bf16.mxu0 0
    %135 = vmatpush1.bf16.msra.mxu0 0
    %136 = vmatprep.subr.bf16.mxu0 0
    %137 = vmatpush1.bf16.msra.mxu0 0
    %138 = vmatprep.subr.bf16.mxu0 0
    %139 = vmatpush1.bf16.msra.mxu0 0
    %140 = vmatprep.mubr.bf16.mxu0 0
    %141 = vmatmul.mubr.bf16.gmra.mrb[0].mxu0 %v106
    %v142 = vpop.f32.mrb[0].mxu0
    %v143 = vadd.f32 %v85, %v142
    %v144 = vpop.f32.mrb[0].mxu0
    %v145 = vpop.f32.mrb[0].mxu0
    %v146 = vadd.f32 %v85, %v145
    %v147 = vpop.f32.mrb[0].mxu0
    %148 = vdwg.mxu0
    %v149 = vmul.f32 %v143, 0.2
    %v150 = vmul.f32 %v146, 0.2
    %v151 = vmax.f32 %v143, %v149
    %v152 = vmax.f32 %v146, %v150
    %v153 = vpack.c.bf16 %v152, %v151
    %v154 = vld [vmem:[#allocation2] sm:$0xff]
    %v155 = vld [vmem:[#allocation2 + $0x8] sm:$0xff]
    %v156 = vld [vmem:[#allocation2 + $0x10] sm:$0xff]
    %v157 = vld [vmem:[#allocation2 + $0x18] sm:$0xff]
    %v158 = vld [vmem:[#allocation2 + $0x20] sm:$0xff]
    %v159 = vld [vmem:[#allocation2 + $0x28] sm:$0xff]
    %v160 = vld [vmem:[#allocation2 + $0x30] sm:$0xff]
    %v161 = vld [vmem:[#allocation2 + $0x38] sm:$0xff]
    %v162 = vld [vmem:[#allocation2 + $0x40] sm:$0xff]
    %v163 = vld [vmem:[#allocation2 + $0x48] sm:$0xff]
    %v164 = vld [vmem:[#allocation2 + $0x50] sm:$0xff]
    %v165 = vld [vmem:[#allocation2 + $0x58] sm:$0xff]
    %v166 = vld [vmem:[#allocation2 + $0x60] sm:$0xff]
    %v167 = vld [vmem:[#allocation2 + $0x68] sm:$0xff]
    %v168 = vld [vmem:[#allocation2 + $0x70] sm:$0xff]
    %v169 = vld [vmem:[#allocation2 + $0x78] sm:$0xff]
    %v170 = vld [vmem:[%s4] sm:$0x3]
    %v172 = vlaneseq
    %v173 = vshrl.u32 %v172, 7
    %v174 = vsub.s32 0, %v173
    %v175 = vrot.slane %v170, %v174
    %v176 = vlaneseq
    %v177 = vshrl.u32 %v176, 7
    %v178 = vsub.s32 1, %v177
    %v179 = vrot.slane %v170, %v178
    %v198 = vunpack.c.l.b16 %v154
    %v199 = vunpack.c.h.b16 %v154
    %v200 = vunpack.c.l.b16 %v155
    %v201 = vunpack.c.h.b16 %v155
    %v202 = vunpack.c.l.b16 %v156
    %v203 = vunpack.c.h.b16 %v156
    %v204 = vunpack.c.l.b16 %v157
    %v205 = vunpack.c.h.b16 %v157
    %v206 = vunpack.c.l.b16 %v158
    %v207 = vunpack.c.h.b16 %v158
    %v208 = vunpack.c.l.b16 %v159
    %v209 = vunpack.c.h.b16 %v159
    %v210 = vunpack.c.l.b16 %v160
    %v211 = vunpack.c.h.b16 %v160
    %v212 = vunpack.c.l.b16 %v161
    %v213 = vunpack.c.h.b16 %v161
    %v214 = vunpack.c.l.b16 %v162
    %v215 = vunpack.c.h.b16 %v162
    %v216 = vunpack.c.l.b16 %v163
    %v217 = vunpack.c.h.b16 %v163
    %v218 = vunpack.c.l.b16 %v164
    %v219 = vunpack.c.h.b16 %v164
    %v220 = vunpack.c.l.b16 %v165
    %v221 = vunpack.c.h.b16 %v165
    %v222 = vunpack.c.l.b16 %v166
    %v223 = vunpack.c.h.b16 %v166
    %v224 = vunpack.c.l.b16 %v167
    %v225 = vunpack.c.h.b16 %v167
    %v226 = vunpack.c.l.b16 %v168
    %v227 = vunpack.c.h.b16 %v168
    %v228 = vunpack.c.l.b16 %v169
    %v229 = vunpack.c.h.b16 %v169
    %v230 = vpack.c.b16 %v200, %v198
    %v231 = vpack.c.b16 %v201, %v199
    %v232 = vpack.c.b16 %v204, %v202
    %v233 = vpack.c.b16 %v205, %v203
    %v234 = vpack.c.b16 %v208, %v206
    %v235 = vpack.c.b16 %v209, %v207
    %v236 = vpack.c.b16 %v212, %v210
    %v237 = vpack.c.b16 %v213, %v211
    %v238 = vpack.c.b16 %v216, %v214
    %v239 = vpack.c.b16 %v217, %v215
    %v240 = vpack.c.b16 %v220, %v218
    %v241 = vpack.c.b16 %v221, %v219
    %v242 = vpack.c.b16 %v224, %v222
    %v243 = vpack.c.b16 %v225, %v223
    %v244 = vpack.c.b16 %v228, %v226
    %v245 = vpack.c.b16 %v229, %v227
    %262 = vmatprep.subr.bf16.mxu0 %v231
    %263 = vmatpush1.bf16.msra.mxu0 %v230
    %264 = vmatprep.subr.bf16.mxu0 %v233
    %265 = vmatpush1.bf16.msra.mxu0 %v232
    %266 = vmatprep.subr.bf16.mxu0 %v235
    %267 = vmatpush1.bf16.msra.mxu0 %v234
    %268 = vmatprep.subr.bf16.mxu0 %v237
    %269 = vmatpush1.bf16.msra.mxu0 %v236
    %270 = vmatprep.subr.bf16.mxu0 %v239
    %271 = vmatpush1.bf16.msra.mxu0 %v238
    %272 = vmatprep.subr.bf16.mxu0 %v241
    %273 = vmatpush1.bf16.msra.mxu0 %v240
    %274 = vmatprep.subr.bf16.mxu0 %v243
    %275 = vmatpush1.bf16.msra.mxu0 %v242
    %276 = vmatprep.subr.bf16.mxu0 %v245
    %277 = vmatpush1.bf16.msra.mxu0 %v244
    %278 = vmatprep.subr.bf16.mxu0 0
    %279 = vmatpush1.bf16.msra.mxu0 0
    %280 = vmatprep.subr.bf16.mxu0 0
    %281 = vmatpush1.bf16.msra.mxu0 0
    %282 = vmatprep.subr.bf16.mxu0 0
    %283 = vmatpush1.bf16.msra.mxu0 0
    %284 = vmatprep.subr.bf16.mxu0 0
    %285 = vmatpush1.bf16.msra.mxu0 0
    %286 = vmatprep.subr.bf16.mxu0 0
    %287 = vmatpush1.bf16.msra.mxu0 0
    %288 = vmatprep.subr.bf16.mxu0 0
    %289 = vmatpush1.bf16.msra.mxu0 0
    %290 = vmatprep.subr.bf16.mxu0 0
    %291 = vmatpush1.bf16.msra.mxu0 0
    %292 = vmatprep.subr.bf16.mxu0 0
    %293 = vmatpush1.bf16.msra.mxu0 0
    %294 = vmatprep.mubr.bf16.mxu0 0
    %295 = vmatmul.mubr.bf16.gmra.mrb[0].mxu0 %v153
    %v296 = vpop.f32.mrb[0].mxu0
    %v297 = vadd.f32 %v175, %v296
    %v298 = vpop.f32.mrb[0].mxu0
    %v299 = vadd.f32 %v179, %v298
    %v300 = vpop.f32.mrb[0].mxu0
    %v301 = vadd.f32 %v175, %v300
    %v302 = vpop.f32.mrb[0].mxu0
    %v303 = vadd.f32 %v179, %v302
    %304 = vdwg.mxu0
    %v305 = vmul.f32 %v297, 0.2
    %v306 = vmul.f32 %v299, 0.2
    %v307 = vmul.f32 %v301, 0.2
    %v308 = vmul.f32 %v303, 0.2
    %v309 = vmax.f32 %v297, %v305
    %v310 = vmax.f32 %v299, %v306
    %v311 = vmax.f32 %v301, %v307
    %v312 = vmax.f32 %v303, %v308
    %v313 = vpack.c.bf16 %v311, %v309
    %v314 = vpack.c.bf16 %v312, %v310
    %v315 = vld [vmem:[#allocation4] sm:$0xff]
    %v316 = vld [vmem:[#allocation4 + $0x8] sm:$0xff]
    %v317 = vld [vmem:[#allocation4 + $0x10] sm:$0xff]
    %v318 = vld [vmem:[#allocation4 + $0x18] sm:$0xff]
    %v319 = vld [vmem:[#allocation4 + $0x20] sm:$0xff]
    %v320 = vld [vmem:[#allocation4 + $0x28] sm:$0xff]
    %v321 = vld [vmem:[#allocation4 + $0x30] sm:$0xff]
    %v322 = vld [vmem:[#allocation4 + $0x38] sm:$0xff]
    %v323 = vld [vmem:[#allocation4 + $0x40] sm:$0xff]
    %v324 = vld [vmem:[#allocation4 + $0x48] sm:$0xff]
    %v325 = vld [vmem:[#allocation4 + $0x50] sm:$0xff]
    %v326 = vld [vmem:[#allocation4 + $0x58] sm:$0xff]
    %v327 = vld [vmem:[#allocation4 + $0x60] sm:$0xff]
    %v328 = vld [vmem:[#allocation4 + $0x68] sm:$0xff]
    %v329 = vld [vmem:[#allocation4 + $0x70] sm:$0xff]
    %v330 = vld [vmem:[#allocation4 + $0x78] sm:$0xff]
    %v331 = vld [vmem:[#allocation4 + $0x80] sm:$0xff]
    %v332 = vld [vmem:[#allocation4 + $0x88] sm:$0xff]
    %v333 = vld [vmem:[#allocation4 + $0x90] sm:$0xff]
    %v334 = vld [vmem:[#allocation4 + $0x98] sm:$0xff]
    %v335 = vld [vmem:[#allocation4 + $0xa0] sm:$0xff]
    %v336 = vld [vmem:[#allocation4 + $0xa8] sm:$0xff]
    %v337 = vld [vmem:[#allocation4 + $0xb0] sm:$0xff]
    %v338 = vld [vmem:[#allocation4 + $0xb8] sm:$0xff]
    %v339 = vld [vmem:[#allocation4 + $0xc0] sm:$0xff]
    %v340 = vld [vmem:[#allocation4 + $0xc8] sm:$0xff]
    %v341 = vld [vmem:[#allocation4 + $0xd0] sm:$0xff]
    %v342 = vld [vmem:[#allocation4 + $0xd8] sm:$0xff]
    %v343 = vld [vmem:[#allocation4 + $0xe0] sm:$0xff]
    %v344 = vld [vmem:[#allocation4 + $0xe8] sm:$0xff]
    %v345 = vld [vmem:[#allocation4 + $0xf0] sm:$0xff]
    %v346 = vld [vmem:[#allocation4 + $0xf8] sm:$0xff]
    %v347 = vld [vmem:[#allocation4 + $0x100] sm:$0xff]
    %v348 = vld [vmem:[#allocation4 + $0x108] sm:$0xff]
    %v349 = vld [vmem:[#allocation4 + $0x110] sm:$0xff]
    %v350 = vld [vmem:[#allocation4 + $0x118] sm:$0xff]
    %v351 = vld [vmem:[#allocation4 + $0x120] sm:$0xff]
    %v352 = vld [vmem:[#allocation4 + $0x128] sm:$0xff]
    %v353 = vld [vmem:[#allocation4 + $0x130] sm:$0xff]
    %v354 = vld [vmem:[#allocation4 + $0x138] sm:$0xff]
    %v355 = vld [vmem:[#allocation4 + $0x140] sm:$0xff]
    %v356 = vld [vmem:[#allocation4 + $0x148] sm:$0xff]
    %v357 = vld [vmem:[#allocation4 + $0x150] sm:$0xff]
    %v358 = vld [vmem:[#allocation4 + $0x158] sm:$0xff]
    %v359 = vld [vmem:[#allocation4 + $0x160] sm:$0xff]
    %v360 = vld [vmem:[#allocation4 + $0x168] sm:$0xff]
    %v361 = vld [vmem:[#allocation4 + $0x170] sm:$0xff]
    %v362 = vld [vmem:[#allocation4 + $0x178] sm:$0xff]
    %v363 = vld [vmem:[#allocation4 + $0x180] sm:$0xff]
    %v364 = vld [vmem:[#allocation4 + $0x188] sm:$0xff]
    %v365 = vld [vmem:[#allocation4 + $0x190] sm:$0xff]
    %v366 = vld [vmem:[#allocation4 + $0x198] sm:$0xff]
    %v367 = vld [vmem:[#allocation4 + $0x1a0] sm:$0xff]
    %v368 = vld [vmem:[#allocation4 + $0x1a8] sm:$0xff]
    %v369 = vld [vmem:[#allocation4 + $0x1b0] sm:$0xff]
    %v370 = vld [vmem:[#allocation4 + $0x1b8] sm:$0xff]
    %v371 = vld [vmem:[#allocation4 + $0x1c0] sm:$0xff]
    %v372 = vld [vmem:[#allocation4 + $0x1c8] sm:$0xff]
    %v373 = vld [vmem:[#allocation4 + $0x1d0] sm:$0xff]
    %v374 = vld [vmem:[#allocation4 + $0x1d8] sm:$0xff]
    %v375 = vld [vmem:[#allocation4 + $0x1e0] sm:$0xff]
    %v376 = vld [vmem:[#allocation4 + $0x1e8] sm:$0xff]
    %v377 = vld [vmem:[#allocation4 + $0x1f0] sm:$0xff]
    %v378 = vld [vmem:[#allocation4 + $0x1f8] sm:$0xff]
    %v379 = vld [vmem:[%s6] sm:$0xf]
    %v381 = vlaneseq
    %v382 = vshrl.u32 %v381, 7
    %v383 = vsub.s32 0, %v382
    %v384 = vrot.slane %v379, %v383
    %v385 = vlaneseq
    %v386 = vshrl.u32 %v385, 7
    %v387 = vsub.s32 1, %v386
    %v388 = vrot.slane %v379, %v387
    %v389 = vlaneseq
    %v390 = vshrl.u32 %v389, 7
    %v391 = vsub.s32 2, %v390
    %v392 = vrot.slane %v379, %v391
    %v393 = vlaneseq
    %v394 = vshrl.u32 %v393, 7
    %v395 = vsub.s32 3, %v394
    %v396 = vrot.slane %v379, %v395
    %v465 = vunpack.c.l.b16 %v315
    %v466 = vunpack.c.h.b16 %v315
    %v467 = vunpack.c.l.b16 %v316
    %v468 = vunpack.c.h.b16 %v316
    %v469 = vunpack.c.l.b16 %v317
    %v470 = vunpack.c.h.b16 %v317
    %v471 = vunpack.c.l.b16 %v318
    %v472 = vunpack.c.h.b16 %v318
    %v473 = vunpack.c.l.b16 %v319
    %v474 = vunpack.c.h.b16 %v319
    %v475 = vunpack.c.l.b16 %v320
    %v476 = vunpack.c.h.b16 %v320
    %v477 = vunpack.c.l.b16 %v321
    %v478 = vunpack.c.h.b16 %v321
    %v479 = vunpack.c.l.b16 %v322
    %v480 = vunpack.c.h.b16 %v322
    %v481 = vunpack.c.l.b16 %v323
    %v482 = vunpack.c.h.b16 %v323
    %v483 = vunpack.c.l.b16 %v324
    %v484 = vunpack.c.h.b16 %v324
    %v485 = vunpack.c.l.b16 %v325
    %v486 = vunpack.c.h.b16 %v325
    %v487 = vunpack.c.l.b16 %v326
    %v488 = vunpack.c.h.b16 %v326
    %v489 = vunpack.c.l.b16 %v327
    %v490 = vunpack.c.h.b16 %v327
    %v491 = vunpack.c.l.b16 %v328
    %v492 = vunpack.c.h.b16 %v328
    %v493 = vunpack.c.l.b16 %v329
    %v494 = vunpack.c.h.b16 %v329
    %v495 = vunpack.c.l.b16 %v330
    %v496 = vunpack.c.h.b16 %v330
    %v497 = vunpack.c.l.b16 %v331
    %v498 = vunpack.c.h.b16 %v331
    %v499 = vunpack.c.l.b16 %v332
    %v500 = vunpack.c.h.b16 %v332
    %v501 = vunpack.c.l.b16 %v333
    %v502 = vunpack.c.h.b16 %v333
    %v503 = vunpack.c.l.b16 %v334
    %v504 = vunpack.c.h.b16 %v334
    %v505 = vunpack.c.l.b16 %v335
    %v506 = vunpack.c.h.b16 %v335
    %v507 = vunpack.c.l.b16 %v336
    %v508 = vunpack.c.h.b16 %v336
    %v509 = vunpack.c.l.b16 %v337
    %v510 = vunpack.c.h.b16 %v337
    %v511 = vunpack.c.l.b16 %v338
    %v512 = vunpack.c.h.b16 %v338
    %v513 = vunpack.c.l.b16 %v339
    %v514 = vunpack.c.h.b16 %v339
    %v515 = vunpack.c.l.b16 %v340
    %v516 = vunpack.c.h.b16 %v340
    %v517 = vunpack.c.l.b16 %v341
    %v518 = vunpack.c.h.b16 %v341
    %v519 = vunpack.c.l.b16 %v342
    %v520 = vunpack.c.h.b16 %v342
    %v521 = vunpack.c.l.b16 %v343
    %v522 = vunpack.c.h.b16 %v343
    %v523 = vunpack.c.l.b16 %v344
    %v524 = vunpack.c.h.b16 %v344
    %v525 = vunpack.c.l.b16 %v345
    %v526 = vunpack.c.h.b16 %v345
    %v527 = vunpack.c.l.b16 %v346
    %v528 = vunpack.c.h.b16 %v346
    %v529 = vunpack.c.l.b16 %v347
    %v530 = vunpack.c.h.b16 %v347
    %v531 = vunpack.c.l.b16 %v348
    %v532 = vunpack.c.h.b16 %v348
    %v533 = vunpack.c.l.b16 %v349
    %v534 = vunpack.c.h.b16 %v349
    %v535 = vunpack.c.l.b16 %v350
    %v536 = vunpack.c.h.b16 %v350
    %v537 = vunpack.c.l.b16 %v351
    %v538 = vunpack.c.h.b16 %v351
    %v539 = vunpack.c.l.b16 %v352
    %v540 = vunpack.c.h.b16 %v352
    %v541 = vunpack.c.l.b16 %v353
    %v542 = vunpack.c.h.b16 %v353
    %v543 = vunpack.c.l.b16 %v354
    %v544 = vunpack.c.h.b16 %v354
    %v545 = vunpack.c.l.b16 %v355
    %v546 = vunpack.c.h.b16 %v355
    %v547 = vunpack.c.l.b16 %v356
    %v548 = vunpack.c.h.b16 %v356
    %v549 = vunpack.c.l.b16 %v357
    %v550 = vunpack.c.h.b16 %v357
    %v551 = vunpack.c.l.b16 %v358
    %v552 = vunpack.c.h.b16 %v358
    %v553 = vunpack.c.l.b16 %v359
    %v554 = vunpack.c.h.b16 %v359
    %v555 = vunpack.c.l.b16 %v360
    %v556 = vunpack.c.h.b16 %v360
    %v557 = vunpack.c.l.b16 %v361
    %v558 = vunpack.c.h.b16 %v361
    %v559 = vunpack.c.l.b16 %v362
    %v560 = vunpack.c.h.b16 %v362
    %v561 = vunpack.c.l.b16 %v363
    %v562 = vunpack.c.h.b16 %v363
    %v563 = vunpack.c.l.b16 %v364
    %v564 = vunpack.c.h.b16 %v364
    %v565 = vunpack.c.l.b16 %v365
    %v566 = vunpack.c.h.b16 %v365
    %v567 = vunpack.c.l.b16 %v366
    %v568 = vunpack.c.h.b16 %v366
    %v569 = vunpack.c.l.b16 %v367
    %v570 = vunpack.c.h.b16 %v367
    %v571 = vunpack.c.l.b16 %v368
    %v572 = vunpack.c.h.b16 %v368
    %v573 = vunpack.c.l.b16 %v369
    %v574 = vunpack.c.h.b16 %v369
    %v575 = vunpack.c.l.b16 %v370
    %v576 = vunpack.c.h.b16 %v370
    %v577 = vunpack.c.l.b16 %v371
    %v578 = vunpack.c.h.b16 %v371
    %v579 = vunpack.c.l.b16 %v372
    %v580 = vunpack.c.h.b16 %v372
    %v581 = vunpack.c.l.b16 %v373
    %v582 = vunpack.c.h.b16 %v373
    %v583 = vunpack.c.l.b16 %v374
    %v584 = vunpack.c.h.b16 %v374
    %v585 = vunpack.c.l.b16 %v375
    %v586 = vunpack.c.h.b16 %v375
    %v587 = vunpack.c.l.b16 %v376
    %v588 = vunpack.c.h.b16 %v376
    %v589 = vunpack.c.l.b16 %v377
    %v590 = vunpack.c.h.b16 %v377
    %v591 = vunpack.c.l.b16 %v378
    %v592 = vunpack.c.h.b16 %v378
    %v593 = vpack.c.b16 %v469, %v465
    %v594 = vpack.c.b16 %v470, %v466
    %v595 = vpack.c.b16 %v471, %v467
    %v596 = vpack.c.b16 %v472, %v468
    %v597 = vpack.c.b16 %v477, %v473
    %v598 = vpack.c.b16 %v478, %v474
    %v599 = vpack.c.b16 %v479, %v475
    %v600 = vpack.c.b16 %v480, %v476
    %v601 = vpack.c.b16 %v485, %v481
    %v602 = vpack.c.b16 %v486, %v482
    %v603 = vpack.c.b16 %v487, %v483
    %v604 = vpack.c.b16 %v488, %v484
    %v605 = vpack.c.b16 %v493, %v489
    %v606 = vpack.c.b16 %v494, %v490
    %v607 = vpack.c.b16 %v495, %v491
    %v608 = vpack.c.b16 %v496, %v492
    %v609 = vpack.c.b16 %v501, %v497
    %v610 = vpack.c.b16 %v502, %v498
    %v611 = vpack.c.b16 %v503, %v499
    %v612 = vpack.c.b16 %v504, %v500
    %v613 = vpack.c.b16 %v509, %v505
    %v614 = vpack.c.b16 %v510, %v506
    %v615 = vpack.c.b16 %v511, %v507
    %v616 = vpack.c.b16 %v512, %v508
    %v617 = vpack.c.b16 %v517, %v513
    %v618 = vpack.c.b16 %v518, %v514
    %v619 = vpack.c.b16 %v519, %v515
    %v620 = vpack.c.b16 %v520, %v516
    %v621 = vpack.c.b16 %v525, %v521
    %v622 = vpack.c.b16 %v526, %v522
    %v623 = vpack.c.b16 %v527, %v523
    %v624 = vpack.c.b16 %v528, %v524
    %v625 = vpack.c.b16 %v533, %v529
    %v626 = vpack.c.b16 %v534, %v530
    %v627 = vpack.c.b16 %v535, %v531
    %v628 = vpack.c.b16 %v536, %v532
    %v629 = vpack.c.b16 %v541, %v537
    %v630 = vpack.c.b16 %v542, %v538
    %v631 = vpack.c.b16 %v543, %v539
    %v632 = vpack.c.b16 %v544, %v540
    %v633 = vpack.c.b16 %v549, %v545
    %v634 = vpack.c.b16 %v550, %v546
    %v635 = vpack.c.b16 %v551, %v547
    %v636 = vpack.c.b16 %v552, %v548
    %v637 = vpack.c.b16 %v557, %v553
    %v638 = vpack.c.b16 %v558, %v554
    %v639 = vpack.c.b16 %v559, %v555
    %v640 = vpack.c.b16 %v560, %v556
    %v641 = vpack.c.b16 %v565, %v561
    %v642 = vpack.c.b16 %v566, %v562
    %v643 = vpack.c.b16 %v567, %v563
    %v644 = vpack.c.b16 %v568, %v564
    %v645 = vpack.c.b16 %v573, %v569
    %v646 = vpack.c.b16 %v574, %v570
    %v647 = vpack.c.b16 %v575, %v571
    %v648 = vpack.c.b16 %v576, %v572
    %v649 = vpack.c.b16 %v581, %v577
    %v650 = vpack.c.b16 %v582, %v578
    %v651 = vpack.c.b16 %v583, %v579
    %v652 = vpack.c.b16 %v584, %v580
    %v653 = vpack.c.b16 %v589, %v585
    %v654 = vpack.c.b16 %v590, %v586
    %v655 = vpack.c.b16 %v591, %v587
    %v656 = vpack.c.b16 %v592, %v588
    %721 = vmatprep.subr.bf16.mxu0 %v594
    %722 = vmatpush1.bf16.msra.mxu0 %v593
    %723 = vmatprep.subr.bf16.mxu0 %v598
    %724 = vmatpush1.bf16.msra.mxu0 %v597
    %725 = vmatprep.subr.bf16.mxu0 %v602
    %726 = vmatpush1.bf16.msra.mxu0 %v601
    %727 = vmatprep.subr.bf16.mxu0 %v606
    %728 = vmatpush1.bf16.msra.mxu0 %v605
    %729 = vmatprep.subr.bf16.mxu0 %v610
    %730 = vmatpush1.bf16.msra.mxu0 %v609
    %731 = vmatprep.subr.bf16.mxu0 %v614
    %732 = vmatpush1.bf16.msra.mxu0 %v613
    %733 = vmatprep.subr.bf16.mxu0 %v618
    %734 = vmatpush1.bf16.msra.mxu0 %v617
    %735 = vmatprep.subr.bf16.mxu0 %v622
    %736 = vmatpush1.bf16.msra.mxu0 %v621
    %737 = vmatprep.subr.bf16.mxu0 %v626
    %738 = vmatpush1.bf16.msra.mxu0 %v625
    %739 = vmatprep.subr.bf16.mxu0 %v630
    %740 = vmatpush1.bf16.msra.mxu0 %v629
    %741 = vmatprep.subr.bf16.mxu0 %v634
    %742 = vmatpush1.bf16.msra.mxu0 %v633
    %743 = vmatprep.subr.bf16.mxu0 %v638
    %744 = vmatpush1.bf16.msra.mxu0 %v637
    %745 = vmatprep.subr.bf16.mxu0 %v642
    %746 = vmatpush1.bf16.msra.mxu0 %v641
    %747 = vmatprep.subr.bf16.mxu0 %v646
    %748 = vmatpush1.bf16.msra.mxu0 %v645
    %749 = vmatprep.subr.bf16.mxu0 %v650
    %750 = vmatpush1.bf16.msra.mxu0 %v649
    %751 = vmatprep.subr.bf16.mxu0 %v654
    %752 = vmatpush1.bf16.msra.mxu0 %v653
    %753 = vmatprep.mubr.bf16.mxu0 %v314
    %754 = vmatmul.mubr.bf16.gmra.mrb[0].mxu0 %v313
    %v755 = vpop.f32.mrb[0].mxu0
    %v756 = vadd.f32 %v384, %v755
    %v757 = vpop.f32.mrb[0].mxu0
    %v758 = vadd.f32 %v388, %v757
    %v759 = vpop.f32.mrb[0].mxu0
    %v760 = vadd.f32 %v384, %v759
    %v761 = vpop.f32.mrb[0].mxu0
    %v762 = vadd.f32 %v388, %v761
    %763 = vdwg.mxu0
    %764 = vmatprep.subr.bf16.mxu0 %v596
    %765 = vmatpush1.bf16.msra.mxu0 %v595
    %766 = vmatprep.subr.bf16.mxu0 %v600
    %767 = vmatpush1.bf16.msra.mxu0 %v599
    %768 = vmatprep.subr.bf16.mxu0 %v604
    %769 = vmatpush1.bf16.msra.mxu0 %v603
    %770 = vmatprep.subr.bf16.mxu0 %v608
    %771 = vmatpush1.bf16.msra.mxu0 %v607
    %772 = vmatprep.subr.bf16.mxu0 %v612
    %773 = vmatpush1.bf16.msra.mxu0 %v611
    %774 = vmatprep.subr.bf16.mxu0 %v616
    %775 = vmatpush1.bf16.msra.mxu0 %v615
    %776 = vmatprep.subr.bf16.mxu0 %v620
    %777 = vmatpush1.bf16.msra.mxu0 %v619
    %778 = vmatprep.subr.bf16.mxu0 %v624
    %779 = vmatpush1.bf16.msra.mxu0 %v623
    %780 = vmatprep.subr.bf16.mxu0 %v628
    %781 = vmatpush1.bf16.msra.mxu0 %v627
    %782 = vmatprep.subr.bf16.mxu0 %v632
    %783 = vmatpush1.bf16.msra.mxu0 %v631
    %784 = vmatprep.subr.bf16.mxu0 %v636
    %785 = vmatpush1.bf16.msra.mxu0 %v635
    %786 = vmatprep.subr.bf16.mxu0 %v640
    %787 = vmatpush1.bf16.msra.mxu0 %v639
    %788 = vmatprep.subr.bf16.mxu0 %v644
    %789 = vmatpush1.bf16.msra.mxu0 %v643
    %790 = vmatprep.subr.bf16.mxu0 %v648
    %791 = vmatpush1.bf16.msra.mxu0 %v647
    %792 = vmatprep.subr.bf16.mxu0 %v652
    %793 = vmatpush1.bf16.msra.mxu0 %v651
    %794 = vmatprep.subr.bf16.mxu0 %v656
    %795 = vmatpush1.bf16.msra.mxu0 %v655
    %796 = vmatprep.mubr.bf16.mxu0 %v314
    %797 = vmatmul.mubr.bf16.gmra.mrb[0].mxu0 %v313
    %v798 = vpop.f32.mrb[0].mxu0
    %v799 = vadd.f32 %v392, %v798
    %v800 = vpop.f32.mrb[0].mxu0
    %v801 = vadd.f32 %v396, %v800
    %v802 = vpop.f32.mrb[0].mxu0
    %v803 = vadd.f32 %v392, %v802
    %v804 = vpop.f32.mrb[0].mxu0
    %v805 = vadd.f32 %v396, %v804
    %806 = vdwg.mxu0
    %v807 = vmul.f32 %v756, 0.2
    %v808 = vmul.f32 %v758, 0.2
    %v809 = vmul.f32 %v799, 0.2
    %v810 = vmul.f32 %v801, 0.2
    %v811 = vmul.f32 %v760, 0.2
    %v812 = vmul.f32 %v762, 0.2
    %v813 = vmul.f32 %v803, 0.2
    %v814 = vmul.f32 %v805, 0.2
    %v815 = vmax.f32 %v756, %v807
    %v816 = vmax.f32 %v758, %v808
    %v817 = vmax.f32 %v799, %v809
    %v818 = vmax.f32 %v801, %v810
    %v819 = vmax.f32 %v760, %v811
    %v820 = vmax.f32 %v762, %v812
    %v821 = vmax.f32 %v803, %v813
    %v822 = vmax.f32 %v805, %v814
    %v823 = vpack.c.bf16 %v819, %v815
    %v824 = vpack.c.bf16 %v820, %v816
    %v825 = vpack.c.bf16 %v821, %v817
    %v826 = vpack.c.bf16 %v822, %v818
    %v827 = vld [vmem:[#allocation6] sm:$0xf]
    %v828 = vld [vmem:[#allocation6 + $0x4] sm:$0xf]
    %v829 = vld [vmem:[#allocation6 + $0x8] sm:$0xf]
    %v830 = vld [vmem:[#allocation6 + $0xc] sm:$0xf]
    %v831 = vld [vmem:[#allocation6 + $0x10] sm:$0xf]
    %v832 = vld [vmem:[#allocation6 + $0x14] sm:$0xf]
    %v833 = vld [vmem:[#allocation6 + $0x18] sm:$0xf]
    %v834 = vld [vmem:[#allocation6 + $0x1c] sm:$0xf]
    %v835 = vld [vmem:[#allocation6 + $0x20] sm:$0xf]
    %v836 = vld [vmem:[#allocation6 + $0x24] sm:$0xf]
    %v837 = vld [vmem:[#allocation6 + $0x28] sm:$0xf]
    %v838 = vld [vmem:[#allocation6 + $0x2c] sm:$0xf]
    %v839 = vld [vmem:[#allocation6 + $0x30] sm:$0xf]
    %v840 = vld [vmem:[#allocation6 + $0x34] sm:$0xf]
    %v841 = vld [vmem:[#allocation6 + $0x38] sm:$0xf]
    %v842 = vld [vmem:[#allocation6 + $0x3c] sm:$0xf]
    %v843 = vld [vmem:[#allocation6 + $0x40] sm:$0xf]
    %v844 = vld [vmem:[#allocation6 + $0x44] sm:$0xf]
    %v845 = vld [vmem:[#allocation6 + $0x48] sm:$0xf]
    %v846 = vld [vmem:[#allocation6 + $0x4c] sm:$0xf]
    %v847 = vld [vmem:[#allocation6 + $0x50] sm:$0xf]
    %v848 = vld [vmem:[#allocation6 + $0x54] sm:$0xf]
    %v849 = vld [vmem:[#allocation6 + $0x58] sm:$0xf]
    %v850 = vld [vmem:[#allocation6 + $0x5c] sm:$0xf]
    %v851 = vld [vmem:[#allocation6 + $0x60] sm:$0xf]
    %v852 = vld [vmem:[#allocation6 + $0x64] sm:$0xf]
    %v853 = vld [vmem:[#allocation6 + $0x68] sm:$0xf]
    %v854 = vld [vmem:[#allocation6 + $0x6c] sm:$0xf]
    %v855 = vld [vmem:[#allocation6 + $0x70] sm:$0xf]
    %v856 = vld [vmem:[#allocation6 + $0x74] sm:$0xf]
    %v857 = vld [vmem:[#allocation6 + $0x78] sm:$0xf]
    %v858 = vld [vmem:[#allocation6 + $0x7c] sm:$0xf]
    %v859 = vld [vmem:[#allocation6 + $0x80] sm:$0xf]
    %v860 = vld [vmem:[#allocation6 + $0x84] sm:$0xf]
    %v861 = vld [vmem:[#allocation6 + $0x88] sm:$0xf]
    %v862 = vld [vmem:[#allocation6 + $0x8c] sm:$0xf]
    %v863 = vld [vmem:[#allocation6 + $0x90] sm:$0xf]
    %v864 = vld [vmem:[#allocation6 + $0x94] sm:$0xf]
    %v865 = vld [vmem:[#allocation6 + $0x98] sm:$0xf]
    %v866 = vld [vmem:[#allocation6 + $0x9c] sm:$0xf]
    %v867 = vld [vmem:[#allocation6 + $0xa0] sm:$0xf]
    %v868 = vld [vmem:[#allocation6 + $0xa4] sm:$0xf]
    %v869 = vld [vmem:[#allocation6 + $0xa8] sm:$0xf]
    %v870 = vld [vmem:[#allocation6 + $0xac] sm:$0xf]
    %v871 = vld [vmem:[#allocation6 + $0xb0] sm:$0xf]
    %v872 = vld [vmem:[#allocation6 + $0xb4] sm:$0xf]
    %v873 = vld [vmem:[#allocation6 + $0xb8] sm:$0xf]
    %v874 = vld [vmem:[#allocation6 + $0xbc] sm:$0xf]
    %v875 = vld [vmem:[#allocation6 + $0xc0] sm:$0xf]
    %v876 = vld [vmem:[#allocation6 + $0xc4] sm:$0xf]
    %v877 = vld [vmem:[#allocation6 + $0xc8] sm:$0xf]
    %v878 = vld [vmem:[#allocation6 + $0xcc] sm:$0xf]
    %v879 = vld [vmem:[#allocation6 + $0xd0] sm:$0xf]
    %v880 = vld [vmem:[#allocation6 + $0xd4] sm:$0xf]
    %v881 = vld [vmem:[#allocation6 + $0xd8] sm:$0xf]
    %v882 = vld [vmem:[#allocation6 + $0xdc] sm:$0xf]
    %v883 = vld [vmem:[#allocation6 + $0xe0] sm:$0xf]
    %v884 = vld [vmem:[#allocation6 + $0xe4] sm:$0xf]
    %v885 = vld [vmem:[#allocation6 + $0xe8] sm:$0xf]
    %v886 = vld [vmem:[#allocation6 + $0xec] sm:$0xf]
    %v887 = vld [vmem:[#allocation6 + $0xf0] sm:$0xf]
    %v888 = vld [vmem:[#allocation6 + $0xf4] sm:$0xf]
    %v889 = vld [vmem:[#allocation6 + $0xf8] sm:$0xf]
    %v890 = vld [vmem:[#allocation6 + $0xfc] sm:$0xf]
    %v891 = vld [vmem:[%s8] sm:$0x1]
    %v893 = vlaneseq
    %v894 = vshrl.u32 %v893, 7
    %v895 = vsub.s32 0, %v894
    %v896 = vrot.slane %v891, %v895
    %v962 = vunpack.c.l.b16 %v827
    %v963 = vunpack.c.l.b16 %v828
    %v964 = vunpack.c.l.b16 %v829
    %v965 = vunpack.c.l.b16 %v830
    %v966 = vunpack.c.l.b16 %v831
    %v967 = vunpack.c.l.b16 %v832
    %v968 = vunpack.c.l.b16 %v833
    %v969 = vunpack.c.l.b16 %v834
    %v970 = vunpack.c.l.b16 %v835
    %v971 = vunpack.c.l.b16 %v836
    %v972 = vunpack.c.l.b16 %v837
    %v973 = vunpack.c.l.b16 %v838
    %v974 = vunpack.c.l.b16 %v839
    %v975 = vunpack.c.l.b16 %v840
    %v976 = vunpack.c.l.b16 %v841
    %v977 = vunpack.c.l.b16 %v842
    %v978 = vunpack.c.l.b16 %v843
    %v979 = vunpack.c.l.b16 %v844
    %v980 = vunpack.c.l.b16 %v845
    %v981 = vunpack.c.l.b16 %v846
    %v982 = vunpack.c.l.b16 %v847
    %v983 = vunpack.c.l.b16 %v848
    %v984 = vunpack.c.l.b16 %v849
    %v985 = vunpack.c.l.b16 %v850
    %v986 = vunpack.c.l.b16 %v851
    %v987 = vunpack.c.l.b16 %v852
    %v988 = vunpack.c.l.b16 %v853
    %v989 = vunpack.c.l.b16 %v854
    %v990 = vunpack.c.l.b16 %v855
    %v991 = vunpack.c.l.b16 %v856
    %v992 = vunpack.c.l.b16 %v857
    %v993 = vunpack.c.l.b16 %v858
    %v994 = vunpack.c.l.b16 %v859
    %v995 = vunpack.c.l.b16 %v860
    %v996 = vunpack.c.l.b16 %v861
    %v997 = vunpack.c.l.b16 %v862
    %v998 = vunpack.c.l.b16 %v863
    %v999 = vunpack.c.l.b16 %v864
    %v1000 = vunpack.c.l.b16 %v865
    %v1001 = vunpack.c.l.b16 %v866
    %v1002 = vunpack.c.l.b16 %v867
    %v1003 = vunpack.c.l.b16 %v868
    %v1004 = vunpack.c.l.b16 %v869
    %v1005 = vunpack.c.l.b16 %v870
    %v1006 = vunpack.c.l.b16 %v871
    %v1007 = vunpack.c.l.b16 %v872
    %v1008 = vunpack.c.l.b16 %v873
    %v1009 = vunpack.c.l.b16 %v874
    %v1010 = vunpack.c.l.b16 %v875
    %v1011 = vunpack.c.l.b16 %v876
    %v1012 = vunpack.c.l.b16 %v877
    %v1013 = vunpack.c.l.b16 %v878
    %v1014 = vunpack.c.l.b16 %v879
    %v1015 = vunpack.c.l.b16 %v880
    %v1016 = vunpack.c.l.b16 %v881
    %v1017 = vunpack.c.l.b16 %v882
    %v1018 = vunpack.c.l.b16 %v883
    %v1019 = vunpack.c.l.b16 %v884
    %v1020 = vunpack.c.l.b16 %v885
    %v1021 = vunpack.c.l.b16 %v886
    %v1022 = vunpack.c.l.b16 %v887
    %v1023 = vunpack.c.l.b16 %v888
    %v1024 = vunpack.c.l.b16 %v889
    %v1025 = vunpack.c.l.b16 %v890
    %v1026 = vpack.c.b16 %v963, %v962
    %v1027 = vpack.c.b16 %v965, %v964
    %v1028 = vpack.c.b16 %v967, %v966
    %v1029 = vpack.c.b16 %v969, %v968
    %v1030 = vpack.c.b16 %v971, %v970
    %v1031 = vpack.c.b16 %v973, %v972
    %v1032 = vpack.c.b16 %v975, %v974
    %v1033 = vpack.c.b16 %v977, %v976
    %v1034 = vpack.c.b16 %v979, %v978
    %v1035 = vpack.c.b16 %v981, %v980
    %v1036 = vpack.c.b16 %v983, %v982
    %v1037 = vpack.c.b16 %v985, %v984
    %v1038 = vpack.c.b16 %v987, %v986
    %v1039 = vpack.c.b16 %v989, %v988
    %v1040 = vpack.c.b16 %v991, %v990
    %v1041 = vpack.c.b16 %v993, %v992
    %v1042 = vpack.c.b16 %v995, %v994
    %v1043 = vpack.c.b16 %v997, %v996
    %v1044 = vpack.c.b16 %v999, %v998
    %v1045 = vpack.c.b16 %v1001, %v1000
    %v1046 = vpack.c.b16 %v1003, %v1002
    %v1047 = vpack.c.b16 %v1005, %v1004
    %v1048 = vpack.c.b16 %v1007, %v1006
    %v1049 = vpack.c.b16 %v1009, %v1008
    %v1050 = vpack.c.b16 %v1011, %v1010
    %v1051 = vpack.c.b16 %v1013, %v1012
    %v1052 = vpack.c.b16 %v1015, %v1014
    %v1053 = vpack.c.b16 %v1017, %v1016
    %v1054 = vpack.c.b16 %v1019, %v1018
    %v1055 = vpack.c.b16 %v1021, %v1020
    %v1056 = vpack.c.b16 %v1023, %v1022
    %v1057 = vpack.c.b16 %v1025, %v1024
    %1090 = vmatprep.subr.bf16.mxu0 0
    %1091 = vmatpush1.bf16.msra.mxu0 %v1026
    %1092 = vmatprep.subr.bf16.mxu0 0
    %1093 = vmatpush1.bf16.msra.mxu0 %v1027
    %1094 = vmatprep.subr.bf16.mxu0 0
    %1095 = vmatpush1.bf16.msra.mxu0 %v1028
    %1096 = vmatprep.subr.bf16.mxu0 0
    %1097 = vmatpush1.bf16.msra.mxu0 %v1029
    %1098 = vmatprep.subr.bf16.mxu0 0
    %1099 = vmatpush1.bf16.msra.mxu0 %v1030
    %1100 = vmatprep.subr.bf16.mxu0 0
    %1101 = vmatpush1.bf16.msra.mxu0 %v1031
    %1102 = vmatprep.subr.bf16.mxu0 0
    %1103 = vmatpush1.bf16.msra.mxu0 %v1032
    %1104 = vmatprep.subr.bf16.mxu0 0
    %1105 = vmatpush1.bf16.msra.mxu0 %v1033
    %1106 = vmatprep.subr.bf16.mxu0 0
    %1107 = vmatpush1.bf16.msra.mxu0 %v1034
    %1108 = vmatprep.subr.bf16.mxu0 0
    %1109 = vmatpush1.bf16.msra.mxu0 %v1035
    %1110 = vmatprep.subr.bf16.mxu0 0
    %1111 = vmatpush1.bf16.msra.mxu0 %v1036
    %1112 = vmatprep.subr.bf16.mxu0 0
    %1113 = vmatpush1.bf16.msra.mxu0 %v1037
    %1114 = vmatprep.subr.bf16.mxu0 0
    %1115 = vmatpush1.bf16.msra.mxu0 %v1038
    %1116 = vmatprep.subr.bf16.mxu0 0
    %1117 = vmatpush1.bf16.msra.mxu0 %v1039
    %1118 = vmatprep.subr.bf16.mxu0 0
    %1119 = vmatpush1.bf16.msra.mxu0 %v1040
    %1120 = vmatprep.subr.bf16.mxu0 0
    %1121 = vmatpush1.bf16.msra.mxu0 %v1041
    %1122 = vmatprep.mubr.bf16.mxu0 %v824
    %1123 = vmatmul.mubr.bf16.gmra.mrb[0].mxu0 %v823
    %v1124 = vpop.f32.mrb[0].mxu0
    %v1125 = vadd.f32 %v896, %v1124
    %v1126 = vpop.f32.mrb[0].mxu0
    %v1127 = vpop.f32.mrb[0].mxu0
    %v1128 = vadd.f32 %v896, %v1127
    %v1129 = vpop.f32.mrb[0].mxu0
    %1130 = vdwg.mxu0
    %1131 = vmatprep.subr.bf16.mxu0 0
    %1132 = vmatpush1.bf16.msra.mxu0 %v1042
    %1133 = vmatprep.subr.bf16.mxu0 0
    %1134 = vmatpush1.bf16.msra.mxu0 %v1043
    %1135 = vmatprep.subr.bf16.mxu0 0
    %1136 = vmatpush1.bf16.msra.mxu0 %v1044
    %1137 = vmatprep.subr.bf16.mxu0 0
    %1138 = vmatpush1.bf16.msra.mxu0 %v1045
    %1139 = vmatprep.subr.bf16.mxu0 0
    %1140 = vmatpush1.bf16.msra.mxu0 %v1046
    %1141 = vmatprep.subr.bf16.mxu0 0
    %1142 = vmatpush1.bf16.msra.mxu0 %v1047
    %1143 = vmatprep.subr.bf16.mxu0 0
    %1144 = vmatpush1.bf16.msra.mxu0 %v1048
    %1145 = vmatprep.subr.bf16.mxu0 0
    %1146 = vmatpush1.bf16.msra.mxu0 %v1049
    %1147 = vmatprep.subr.bf16.mxu0 0
    %1148 = vmatpush1.bf16.msra.mxu0 %v1050
    %1149 = vmatprep.subr.bf16.mxu0 0
    %1150 = vmatpush1.bf16.msra.mxu0 %v1051
    %1151 = vmatprep.subr.bf16.mxu0 0
    %1152 = vmatpush1.bf16.msra.mxu0 %v1052
    %1153 = vmatprep.subr.bf16.mxu0 0
    %1154 = vmatpush1.bf16.msra.mxu0 %v1053
    %1155 = vmatprep.subr.bf16.mxu0 0
    %1156 = vmatpush1.bf16.msra.mxu0 %v1054
    %1157 = vmatprep.subr.bf16.mxu0 0
    %1158 = vmatpush1.bf16.msra.mxu0 %v1055
    %1159 = vmatprep.subr.bf16.mxu0 0
    %1160 = vmatpush1.bf16.msra.mxu0 %v1056
    %1161 = vmatprep.subr.bf16.mxu0 0
    %1162 = vmatpush1.bf16.msra.mxu0 %v1057
    %1163 = vmatprep.mubr.bf16.mxu0 %v826
    %1164 = vmatmul.mubr.bf16.gmra.mrb[0].mxu0 %v825
    %v1165 = vpop.f32.mrb[0].mxu0
    %v1166 = vadd.f32 %v1125, %v1165
    %v1167 = vpop.f32.mrb[0].mxu0
    %v1168 = vpop.f32.mrb[0].mxu0
    %v1169 = vadd.f32 %v1128, %v1168
    %v1170 = vpop.f32.mrb[0].mxu0
    %1171 = vdwg.mxu0
    %v1172 = vtanh.pop %v1166
    %v1173 = vtanh.pop %v1169
    %v1174 = vpack.c.bf16 %v1173, %v1172
    %v1176 = vunpack.c.l.b16 %v1174
    %v1177 = vunpack.c.h.b16 %v1174
    %v1178 = vpack.c.b16 %v1176, %v1176
    %v1179 = vpack.c.b16 %v1177, %v1177
    %1182 = vst [vmem:[%s9] sm:$0xf] %v1178
    %1183 = vst [vmem:[%s9 + $0x4] sm:$0xf] %v1179
    // Predicated region
    $region50: #{generator_forward.1} parent=1 // pred_check
      _
    $region51: #{generator_forward.1} parent=1 // pred_check_branch
      %1185 = sbr.rel (0) target = $region53
    $region52: #{generator_forward.1} parent=1 // pred_region
      _
    $region53: #{generator_forward.1} parent=1 // pred_fallthru
      _
    // Predicated region
    $region54: #{generator_forward.1} parent=1 // pred_check
      _
    $region55: #{generator_forward.1} parent=1 // pred_check_branch
      %1187 = sbr.rel (0) target = $region57
    $region56: #{generator_forward.1} parent=1 // pred_region
      _
    $region57: #{generator_forward.1} parent=1 // pred_fallthru
      _
    %1188 = vsyncpa [#allocation3], 1
    %1189 = vsyncpa [#allocation5], 1

</llo_original>
